<compile_context>
chip_gen: v6e
topology: v6e:2x2x1
jax: 0.10.0
libtpu: 0.0.40
codegen_flags: <defaults>
</compile_context>

<pallas_src>
import functools

import jax
import jax.numpy as jnp
from jax.experimental import pallas as pl
from jax.experimental.pallas import tpu as pltpu


def _cdiv(a: int, b: int) -> int:
    return -(-a // b)


def _round_up(n: int, m: int) -> int:
    return _cdiv(n, m) * m


def _input_gate_kernel(x_ref, h_ref, wi_ref, wm_ref, b_ref, o_ref, *, precision):
    # Two MXU dots accumulated in f32, then bias + sigmoid (exp on the EUP slot).
    acc = jnp.dot(x_ref[...], wi_ref[...],
                  preferred_element_type=jnp.float32, precision=precision)
    acc = acc + jnp.dot(h_ref[...], wm_ref[...],
                        preferred_element_type=jnp.float32, precision=precision)
    o_ref[...] = jax.nn.sigmoid(acc + b_ref[...]).astype(o_ref.dtype)


def prepare_input_gate_params(w_input, b_input, w_memory, b_memory):
    """One-time parameter prep (hoist out of any per-timestep loop).

    w_input:  (IN, H) == torch Linear(inputs, hidden).weight.T
    w_memory: (H, H)  == torch Linear(hidden, hidden).weight.T
    Returns (w_input, w_memory, b_fused[1, H]).
    """
    b_fused = (b_input + b_memory).reshape(1, -1)
    return w_input, w_memory, b_fused


def _build_call(Bp, TB, IN, H, dtype, *, precision, single_buffer_resident):
    def resident_spec(shape):
        kwargs = {}
        if single_buffer_resident:
            # Constant index_map -> one VMEM buffer is enough (halves the resident
            # footprint; relevant on v7x's 64 MiB per-TC VMEM when H is large).
            kwargs["pipeline_mode"] = pl.Buffered(buffer_count=1)
        return pl.BlockSpec(shape, lambda i: (0, 0), **kwargs)

    return pl.pallas_call(
        functools.partial(_input_gate_kernel, precision=precision),
        out_shape=jax.ShapeDtypeStruct((Bp, H), dtype),
        grid=(Bp // TB,),
        in_specs=[
            pl.BlockSpec((TB, IN), lambda i: (i, 0)),   # x: tiled over batch
            pl.BlockSpec((TB, H), lambda i: (i, 0)),    # hidden: tiled over batch
            resident_spec((IN, H)),                     # w_input: VMEM-resident
            resident_spec((H, H)),                      # w_memory: VMEM-resident
            resident_spec((1, H)),                      # fused bias: VMEM-resident
        ],
        out_specs=pl.BlockSpec((TB, H), lambda i: (i, 0)),
        compiler_params=pltpu.CompilerParams(
            # Batch tiles are independent.  NOTE: with grid=(1,) (small batch) this
            # cannot shard across v7x's 2 TensorCores -- see TODO above (fuse gates
            # or timesteps to get >=2 parallel grid steps).
            dimension_semantics=("parallel",),
        ),
    )


def input_gate(x, hidden, w_input, w_memory, b_fused, *, tb=512, precision=None):
    """Pallas InputGate.forward:  sigmoid(x @ w_input + hidden @ w_memory + b_fused).

    x:        (B, IN) float32
    hidden:   (B, H)  float32
    w_input:  (IN, H) float32
    w_memory: (H, H)  float32
    b_fused:  (1, H)  float32   (b_input + b_memory, from prepare_input_gate_params)
    returns:  (B, H)  float32
    """
    B, IN = x.shape
    H = w_memory.shape[1]

    # Balanced batch tiling: at most 7 padded rows, never up to TB-8.
    TB = _round_up(_cdiv(B, _cdiv(B, tb)), 8)
    Bp = _cdiv(B, TB) * TB
    if Bp != B:
        x = jnp.pad(x, ((0, Bp - B), (0, 0)))
        hidden = jnp.pad(hidden, ((0, Bp - B), (0, 0)))

    args = (x, hidden, w_input, w_memory, b_fused)
    try:
        out = _build_call(Bp, TB, IN, H, x.dtype, precision=precision,
                          single_buffer_resident=True)(*args)
    except Exception:
        # Fallback for jax versions that reject pipeline_mode=pl.Buffered(1) on inputs.
        out = _build_call(Bp, TB, IN, H, x.dtype, precision=precision,
                          single_buffer_resident=False)(*args)

    return out if Bp == B else out[:B]


if __name__ == "__main__":
    # Module config: InputGate(inputs=16, hidden=32, activation=nn.Sigmoid())
    B, IN, H = 8, 16, 32

    key = jax.random.PRNGKey(0)
    kx, kh, kwi, kbi, kwm, kbm = jax.random.split(key, 6)

    x = jax.random.normal(kx, (B, IN), dtype=jnp.float32)
    hidden = jax.random.normal(kh, (B, H), dtype=jnp.float32)

    # Deterministic parameter init mimicking nn.Linear's U(-1/sqrt(fan_in), ..)
    def uniform_init(k, shape, fan_in):
        bound = 1.0 / jnp.sqrt(float(fan_in))
        return jax.random.uniform(k, shape, jnp.float32, -bound, bound)

    w_input = uniform_init(kwi, (IN, H), IN)    # Linear(inputs, hidden).weight.T
    b_input = uniform_init(kbi, (H,), IN)
    w_memory = uniform_init(kwm, (H, H), H)     # Linear(hidden, hidden).weight.T
    b_memory = uniform_init(kbm, (H,), H)

    # One-time parameter prep (outside any timestep loop).
    w_i, w_m, b_f = prepare_input_gate_params(w_input, b_input, w_memory, b_memory)

    out = input_gate(x, hidden, w_i, w_m, b_f)
    out = jax.block_until_ready(out)

    # Reference check (plain JAX) to validate semantics.
    ref = jax.nn.sigmoid((x @ w_input + b_input) + (hidden @ w_memory + b_memory))
    assert out.shape == (B, H)
    assert jnp.allclose(out, ref, atol=1e-5, rtol=1e-5)

    print("KERNEL_OK")
</pallas_src>

<mosaic_0001>
module attributes {stable_mosaic.version = 11 : i64} {
  func.func @_input_gate_kernel(%arg0: i32, %arg1: memref<8x16xf32, #tpu.memory_space<vmem>>, %arg2: memref<8x32xf32, #tpu.memory_space<vmem>>, %arg3: memref<16x32xf32, #tpu.memory_space<vmem>>, %arg4: memref<32x32xf32, #tpu.memory_space<vmem>>, %arg5: memref<1x32xf32, #tpu.memory_space<vmem>>, %arg6: memref<8x32xf32, #tpu.memory_space<vmem>>) attributes {dimension_semantics = [#tpu.dimension_semantics<parallel>], iteration_bounds = array<i64: 1>, scalar_prefetch = 0 : i64, scratch_operands = 0 : i64, tpu.core_type = #tpu.core_type<tc>, window_params = [{transform_indices = @transform_0, window_bounds = array<i64: 8, 16>}, {transform_indices = @transform_1, window_bounds = array<i64: 8, 32>}, {pipeline_mode = #tpu.pipeline_mode<synchronous>, transform_indices = @transform_2, window_bounds = array<i64: 16, 32>}, {pipeline_mode = #tpu.pipeline_mode<synchronous>, transform_indices = @transform_3, window_bounds = array<i64: 32, 32>}, {pipeline_mode = #tpu.pipeline_mode<synchronous>, transform_indices = @transform_4, window_bounds = array<i64: 1, 32>}, {transform_indices = @transform_5, window_bounds = array<i64: 8, 32>}]} {
    %c0 = arith.constant 0 : index
    %c0_0 = arith.constant 0 : index
    %0 = vector.load %arg1[%c0, %c0_0] : memref<8x16xf32, #tpu.memory_space<vmem>>, vector<8x16xf32>
    %c0_1 = arith.constant 0 : index
    %c0_2 = arith.constant 0 : index
    %1 = vector.load %arg3[%c0_1, %c0_2] : memref<16x32xf32, #tpu.memory_space<vmem>>, vector<16x32xf32>
    %cst = arith.constant dense<0.000000e+00> : vector<8x32xf32>
    %2 = tpu.matmul %0, %1, %cst {dimension_numbers = #tpu.dot_dimension_numbers<[1], [0], [0], [1], [0, 0, 1, 1], [], []>} : vector<8x16xf32>, vector<16x32xf32>, vector<8x32xf32> -> vector<8x32xf32>
    %c0_3 = arith.constant 0 : index
    %c0_4 = arith.constant 0 : index
    %3 = vector.load %arg2[%c0_3, %c0_4] : memref<8x32xf32, #tpu.memory_space<vmem>>, vector<8x32xf32>
    %c0_5 = arith.constant 0 : index
    %c0_6 = arith.constant 0 : index
    %4 = vector.load %arg4[%c0_5, %c0_6] : memref<32x32xf32, #tpu.memory_space<vmem>>, vector<32x32xf32>
    %cst_7 = arith.constant dense<0.000000e+00> : vector<8x32xf32>
    %5 = tpu.matmul %3, %4, %cst_7 {dimension_numbers = #tpu.dot_dimension_numbers<[1], [0], [0], [1], [0, 0, 1, 1], [], []>} : vector<8x32xf32>, vector<32x32xf32>, vector<8x32xf32> -> vector<8x32xf32>
    %6 = arith.addf %2, %5 : vector<8x32xf32>
    %c0_8 = arith.constant 0 : index
    %c0_9 = arith.constant 0 : index
    %7 = vector.load %arg5[%c0_8, %c0_9] : memref<1x32xf32, #tpu.memory_space<vmem>>, vector<1x32xf32>
    %8 = vector.broadcast %7 : vector<1x32xf32> to vector<8x32xf32>
    %9 = arith.addf %6, %8 : vector<8x32xf32>
    %10 = arith.negf %9 : vector<8x32xf32>
    %11 = math.exp %10 : vector<8x32xf32>
    %cst_10 = arith.constant 1.000000e+00 : f32
    %12 = vector.broadcast %cst_10 : f32 to vector<8x32xf32>
    %13 = arith.addf %12, %11 : vector<8x32xf32>
    %14 = arith.divf %12, %13 : vector<8x32xf32>
    %c0_11 = arith.constant 0 : index
    %c0_12 = arith.constant 0 : index
    %15 = vector.load %arg6[%c0_11, %c0_12] : memref<8x32xf32, #tpu.memory_space<vmem>>, vector<8x32xf32>
    tpu.vector_store %arg6[%c0_11, %c0_12], %14 {strides = array<i32>} : memref<8x32xf32, #tpu.memory_space<vmem>>, vector<8x32xf32>,
    return
  }
  func.func @transform_0(%arg0: i32) -> (i32, i32) {
    %c0_i32 = arith.constant 0 : i32
    %c0_i32_0 = arith.constant 0 : i32
    return %arg0, %c0_i32 : i32, i32
  }
  func.func @transform_1(%arg0: i32) -> (i32, i32) {
    %c0_i32 = arith.constant 0 : i32
    %c0_i32_0 = arith.constant 0 : i32
    return %arg0, %c0_i32 : i32, i32
  }
  func.func @transform_2(%arg0: i32) -> (i32, i32) {
    %c0_i32 = arith.constant 0 : i32
    %c0_i32_0 = arith.constant 0 : i32
    %c0_i32_1 = arith.constant 0 : i32
    return %c0_i32, %c0_i32_0 : i32, i32
  }
  func.func @transform_3(%arg0: i32) -> (i32, i32) {
    %c0_i32 = arith.constant 0 : i32
    %c0_i32_0 = arith.constant 0 : i32
    %c0_i32_1 = arith.constant 0 : i32
    return %c0_i32, %c0_i32_0 : i32, i32
  }
  func.func @transform_4(%arg0: i32) -> (i32, i32) {
    %c0_i32 = arith.constant 0 : i32
    %c0_i32_0 = arith.constant 0 : i32
    %c0_i32_1 = arith.constant 0 : i32
    return %c0_i32, %c0_i32_0 : i32, i32
  }
  func.func @transform_5(%arg0: i32) -> (i32, i32) {
    %c0_i32 = arith.constant 0 : i32
    %c0_i32_0 = arith.constant 0 : i32
    return %arg0, %c0_i32 : i32, i32
  }
}

module attributes {stable_mosaic.version = 11 : i64} {
  func.func @_input_gate_kernel(%arg0: i32, %arg1: memref<8x16xf32, #tpu.memory_space<vmem>>, %arg2: memref<8x32xf32, #tpu.memory_space<vmem>>, %arg3: memref<16x32xf32, #tpu.memory_space<vmem>>, %arg4: memref<32x32xf32, #tpu.memory_space<vmem>>, %arg5: memref<1x32xf32, #tpu.memory_space<vmem>>, %arg6: memref<8x32xf32, #tpu.memory_space<vmem>>) attributes {dimension_semantics = [#tpu.dimension_semantics<parallel>], iteration_bounds = array<i64: 1>, scalar_prefetch = 0 : i64, scratch_operands = 0 : i64, tpu.core_type = #tpu.core_type<tc>, window_params = [{transform_indices = @transform_0, window_bounds = array<i64: 8, 16>}, {transform_indices = @transform_1, window_bounds = array<i64: 8, 32>}, {pipeline_mode = #tpu.pipeline_mode<synchronous>, transform_indices = @transform_2, window_bounds = array<i64: 16, 32>}, {pipeline_mode = #tpu.pipeline_mode<synchronous>, transform_indices = @transform_3, window_bounds = array<i64: 32, 32>}, {pipeline_mode = #tpu.pipeline_mode<synchronous>, transform_indices = @transform_4, window_bounds = array<i64: 1, 32>}, {transform_indices = @transform_5, window_bounds = array<i64: 8, 32>}]} {
    %c0 = arith.constant 0 : index
    %c0_0 = arith.constant 0 : index
    %0 = vector.load %arg1[%c0, %c0_0] : memref<8x16xf32, #tpu.memory_space<vmem>>, vector<8x16xf32>
    %c0_1 = arith.constant 0 : index
    %c0_2 = arith.constant 0 : index
    %1 = vector.load %arg3[%c0_1, %c0_2] : memref<16x32xf32, #tpu.memory_space<vmem>>, vector<16x32xf32>
    %cst = arith.constant dense<0.000000e+00> : vector<8x32xf32>
    %2 = tpu.matmul %0, %1, %cst {dimension_numbers = #tpu.dot_dimension_numbers<[1], [0], [0], [1], [0, 0, 1, 1], [], []>} : vector<8x16xf32>, vector<16x32xf32>, vector<8x32xf32> -> vector<8x32xf32>
    %c0_3 = arith.constant 0 : index
    %c0_4 = arith.constant 0 : index
    %3 = vector.load %arg2[%c0_3, %c0_4] : memref<8x32xf32, #tpu.memory_space<vmem>>, vector<8x32xf32>
    %c0_5 = arith.constant 0 : index
    %c0_6 = arith.constant 0 : index
    %4 = vector.load %arg4[%c0_5, %c0_6] : memref<32x32xf32, #tpu.memory_space<vmem>>, vector<32x32xf32>
    %cst_7 = arith.constant dense<0.000000e+00> : vector<8x32xf32>
    %5 = tpu.matmul %3, %4, %cst_7 {dimension_numbers = #tpu.dot_dimension_numbers<[1], [0], [0], [1], [0, 0, 1, 1], [], []>} : vector<8x32xf32>, vector<32x32xf32>, vector<8x32xf32> -> vector<8x32xf32>
    %6 = arith.addf %2, %5 : vector<8x32xf32>
    %c0_8 = arith.constant 0 : index
    %c0_9 = arith.constant 0 : index
    %7 = vector.load %arg5[%c0_8, %c0_9] : memref<1x32xf32, #tpu.memory_space<vmem>>, vector<1x32xf32>
    %8 = vector.broadcast %7 : vector<1x32xf32> to vector<8x32xf32>
    %9 = arith.addf %6, %8 : vector<8x32xf32>
    %10 = arith.negf %9 : vector<8x32xf32>
    %11 = math.exp %10 : vector<8x32xf32>
    %cst_10 = arith.constant 1.000000e+00 : f32
    %12 = vector.broadcast %cst_10 : f32 to vector<8x32xf32>
    %13 = arith.addf %12, %11 : vector<8x32xf32>
    %14 = arith.divf %12, %13 : vector<8x32xf32>
    %c0_11 = arith.constant 0 : index
    %c0_12 = arith.constant 0 : index
    %15 = vector.load %arg6[%c0_11, %c0_12] : memref<8x32xf32, #tpu.memory_space<vmem>>, vector<8x32xf32>
    tpu.vector_store %arg6[%c0_11, %c0_12], %14 {strides = array<i32>} : memref<8x32xf32, #tpu.memory_space<vmem>>, vector<8x32xf32>,
    return
  }
  func.func @transform_0(%arg0: i32) -> (i32, i32) {
    %c0_i32 = arith.constant 0 : i32
    %c0_i32_0 = arith.constant 0 : i32
    return %arg0, %c0_i32 : i32, i32
  }
  func.func @transform_1(%arg0: i32) -> (i32, i32) {
    %c0_i32 = arith.constant 0 : i32
    %c0_i32_0 = arith.constant 0 : i32
    return %arg0, %c0_i32 : i32, i32
  }
  func.func @transform_2(%arg0: i32) -> (i32, i32) {
    %c0_i32 = arith.constant 0 : i32
    %c0_i32_0 = arith.constant 0 : i32
    %c0_i32_1 = arith.constant 0 : i32
    return %c0_i32, %c0_i32_0 : i32, i32
  }
  func.func @transform_3(%arg0: i32) -> (i32, i32) {
    %c0_i32 = arith.constant 0 : i32
    %c0_i32_0 = arith.constant 0 : i32
    %c0_i32_1 = arith.constant 0 : i32
    return %c0_i32, %c0_i32_0 : i32, i32
  }
  func.func @transform_4(%arg0: i32) -> (i32, i32) {
    %c0_i32 = arith.constant 0 : i32
    %c0_i32_0 = arith.constant 0 : i32
    %c0_i32_1 = arith.constant 0 : i32
    return %c0_i32, %c0_i32_0 : i32, i32
  }
  func.func @transform_5(%arg0: i32) -> (i32, i32) {
    %c0_i32 = arith.constant 0 : i32
    %c0_i32_0 = arith.constant 0 : i32
    return %arg0, %c0_i32 : i32, i32
  }
}

</mosaic_0001>

<llo_original>
// kernel: tpu_custom_call.1
$region0: #{tpu_custom_call.1}
  #allocation0 [shape = 'u32[]', space=smem, size = 0x4, offset = 0x4, fixed_abs, tag = 'smem constant byte address 0x4 - core index']
  #allocation1 [shape = 'u32[144,128]{1,0:T(1,128)}', space=vmem, size = 0x12000, scoped, tag = 'internal scratch']
  %s0 = inlined_call_operand.hbm [shape: f32[8,16], index: 0, kind: input, shape index: {}]
  %s1 = inlined_call_operand.hbm [shape: f32[8,32], index: 1, kind: input, shape index: {}]
  %s2 = inlined_call_operand.hbm [shape: f32[16,32], index: 2, kind: input, shape index: {}]
  %s3 = inlined_call_operand.hbm [shape: f32[32,32], index: 3, kind: input, shape index: {}]
  %s4 = inlined_call_operand.vmem [shape: f32[1,32], index: 4, kind: input, shape index: {}]
  %s5 = inlined_call_operand.hbm [shape: f32[8,32], index: 5, kind: output, shape index: {}]
  %s6 = sld [smem:[#allocation0]]
  $region46: #{tpu_custom_call.1} parent=0
    _
  %s8 = ssub.s32 1, %s6
  %s9 = scalar_select 0, %s8, %s6
  $region1: #{tpu_custom_call.1} parent=0
    #allocation2 [shape = 'u8[4096]{0}', space=vmem, size = 0x1000, scoped, tag = 'input window, operand 0, single buffered']
    #allocation3 [shape = 's32[1]{0}', space=sflag, size = 0x4, scoped, tag = 'scoped memory for tpu_custom_call.1']
    #allocation4 [shape = 's32[1]{0}', space=sflag, size = 0x4, scoped, tag = 'scoped memory for tpu_custom_call.1']
    #allocation5 [shape = 'u8[4096]{0}', space=vmem, size = 0x1000, scoped, tag = 'input window, operand 1, single buffered']
    #allocation6 [shape = 's32[1]{0}', space=sflag, size = 0x4, scoped, tag = 'scoped memory for tpu_custom_call.1']
    #allocation7 [shape = 'u8[8192]{0}', space=vmem, size = 0x2000, scoped, tag = 'input window, operand 2, single buffered']
    #allocation8 [shape = 'u8[16384]{0}', space=vmem, size = 0x4000, scoped, tag = 'input window, operand 3, single buffered']
    #allocation9 [shape = 's32[1]{0}', space=sflag, size = 0x4, scoped, tag = 'scoped memory for tpu_custom_call.1']
    #allocation10 [shape = 'u8[4096]{0}', space=vmem, size = 0x1000, scoped, tag = 'output window, operand 0, single buffered']
    %10 = vsyncpa [#allocation3], 0
    %11 = vsyncpa [#allocation6], 0
    %12 = vsyncpa [#allocation9], 0
    %13 = vsyncpa [#allocation4], 0
    // Predicated region
    $region2: #{tpu_custom_call.1} parent=1 // pred_check
      _
    $region3: #{tpu_custom_call.1} parent=1 // pred_check_branch
      %15 = sbr.rel (0) target = $region5
    $region4: #{tpu_custom_call.1} parent=1 // pred_region
      %s17 = ssub.s32 128, 128
      %18 = vsyncadd [#allocation3], %s17
      %s20 = sshll.u32 [#allocation2], 4
      %s21 = int_to_ptr.vmem [resolvable:$true] %s20
      %23 = dma.hbm_to_vmem [thread:$0]  %s0, 128, %s21, [#allocation3]
    $region5: #{tpu_custom_call.1} parent=1 // pred_fallthru
      _
    // Predicated region
    $region6: #{tpu_custom_call.1} parent=1 // pred_check
      _
    $region7: #{tpu_custom_call.1} parent=1 // pred_check_branch
      %25 = sbr.rel (0) target = $region9
    $region8: #{tpu_custom_call.1} parent=1 // pred_region
      %s27 = ssub.s32 128, 128
      %28 = vsyncadd [#allocation6], %s27
      %s30 = sshll.u32 [#allocation5], 4
      %s31 = int_to_ptr.vmem [resolvable:$true] %s30
      %33 = dma.hbm_to_vmem [thread:$0]  %s1, 128, %s31, [#allocation6]
    $region9: #{tpu_custom_call.1} parent=1 // pred_fallthru
      _
    // Predicated region
    $region10: #{tpu_custom_call.1} parent=1 // pred_check
      _
    $region11: #{tpu_custom_call.1} parent=1 // pred_check_branch
      %35 = sbr.rel (0) target = $region13
    $region12: #{tpu_custom_call.1} parent=1 // pred_region
      %s37 = ssub.s32 256, 256
      %38 = vsyncadd [#allocation6], %s37
      %s39 = sshll.u32 [#allocation7], 4
      %s40 = int_to_ptr.vmem [resolvable:$true] %s39
      %45 = dma.hbm_to_vmem [thread:$0]  %s2, 256, %s40, [#allocation6], 128, 128, 8
    $region13: #{tpu_custom_call.1} parent=1 // pred_fallthru
      _
    // Predicated region
    $region14: #{tpu_custom_call.1} parent=1 // pred_check
      _
    $region15: #{tpu_custom_call.1} parent=1 // pred_check_branch
      %47 = sbr.rel (0) target = $region17
    $region16: #{tpu_custom_call.1} parent=1 // pred_region
      %s49 = ssub.s32 512, 512
      %50 = vsyncadd [#allocation9], %s49
      %s51 = sshll.u32 [#allocation8], 4
      %s52 = int_to_ptr.vmem [resolvable:$true] %s51
      %57 = dma.hbm_to_vmem [thread:$0]  %s3, 512, %s52, [#allocation9], 128, 128, 8
    $region17: #{tpu_custom_call.1} parent=1 // pred_fallthru
      _
    // Predicated region
    $region18: #{tpu_custom_call.1} parent=1 // pred_check
      _
    $region19: #{tpu_custom_call.1} parent=1 // pred_check_branch
      %59 = sbr.rel (0) target = $region21
    $region20: #{tpu_custom_call.1} parent=1 // pred_region
      _
    $region21: #{tpu_custom_call.1} parent=1 // pred_fallthru
      _
    // Predicated region
    $region22: #{tpu_custom_call.1} parent=1 // pred_check
      _
    $region23: #{tpu_custom_call.1} parent=1 // pred_check_branch
      %61 = sbr.rel (0) target = $region25
    $region24: #{tpu_custom_call.1} parent=1 // pred_region
      %62 = dma.done [#allocation3], 128
    $region25: #{tpu_custom_call.1} parent=1 // pred_fallthru
      _
    // Predicated region
    $region26: #{tpu_custom_call.1} parent=1 // pred_check
      _
    $region27: #{tpu_custom_call.1} parent=1 // pred_check_branch
      %64 = sbr.rel (0) target = $region29
    $region28: #{tpu_custom_call.1} parent=1 // pred_region
      %65 = dma.done [#allocation6], 128
    $region29: #{tpu_custom_call.1} parent=1 // pred_fallthru
      _
    // Predicated region
    $region30: #{tpu_custom_call.1} parent=1 // pred_check
      _
    $region31: #{tpu_custom_call.1} parent=1 // pred_check_branch
      %67 = sbr.rel (0) target = $region33
    $region32: #{tpu_custom_call.1} parent=1 // pred_region
      %68 = dma.done [#allocation6], 256
    $region33: #{tpu_custom_call.1} parent=1 // pred_fallthru
      _
    // Predicated region
    $region34: #{tpu_custom_call.1} parent=1 // pred_check
      _
    $region35: #{tpu_custom_call.1} parent=1 // pred_check_branch
      %70 = sbr.rel (0) target = $region37
    $region36: #{tpu_custom_call.1} parent=1 // pred_region
      %71 = dma.done [#allocation9], 512
    $region37: #{tpu_custom_call.1} parent=1 // pred_fallthru
      _
    %v72 = vld [vmem:[#allocation2] sm:$0xff]
    %v73 = vld [vmem:[#allocation7] sm:$0xff]
    %v74 = vld [vmem:[#allocation7 + $0x8] sm:$0xff]
    %v75 = vld [vmem:[#allocation5] sm:$0xff]
    %v76 = vld [vmem:[#allocation8] sm:$0xff]
    %v77 = vld [vmem:[#allocation8 + $0x8] sm:$0xff]
    %v78 = vld [vmem:[#allocation8 + $0x10] sm:$0xff]
    %v79 = vld [vmem:[#allocation8 + $0x18] sm:$0xff]
    %vm80 = vcmask 261120
    %v82 = vsel %vm80, %v75, 0
    %84 = vmatprep.subr.mxu0 0.0
    %85 = vmatpush1.msra.mxu0 0.0
    %86 = vmatprep.subr.mxu0 0.0
    %87 = vmatpush1.msra.mxu0 0.0
    %88 = vmatprep.subr.mxu0 0.0
    %89 = vmatpush1.msra.mxu0 0.0
    %90 = vmatprep.subr.mxu0 0.0
    %91 = vmatpush1.msra.mxu0 0.0
    %92 = vmatprep.subr.mxu0 0.0
    %93 = vmatpush1.msra.mxu0 0.0
    %94 = vmatprep.subr.mxu0 0.0
    %95 = vmatpush1.msra.mxu0 0.0
    %96 = vmatprep.subr.mxu0 0.0
    %97 = vmatpush1.msra.mxu0 0.0
    %98 = vmatprep.subr.mxu0 0.0
    %99 = vmatpush1.msra.mxu0 0.0
    %100 = vmatprep.subr.mxu0 0.0
    %101 = vmatpush1.msra.mxu0 0.0
    %102 = vmatprep.subr.mxu0 0.0
    %103 = vmatpush1.msra.mxu0 0.0
    %104 = vmatprep.subr.mxu0 0.0
    %105 = vmatpush1.msra.mxu0 0.0
    %106 = vmatprep.subr.mxu0 0.0
    %107 = vmatpush1.msra.mxu0 0.0
    %108 = vmatprep.subr.mxu0 0.0
    %109 = vmatpush1.msra.mxu0 %v79
    %110 = vmatprep.subr.mxu0 0.0
    %111 = vmatpush1.msra.mxu0 %v78
    %112 = vmatprep.subr.mxu0 0.0
    %113 = vmatpush1.msra.mxu0 %v77
    %114 = vmatprep.subr.mxu0 0.0
    %115 = vmatpush1.msra.mxu0 %v76
    %116 = vmatprep.subr.mxu0 0.0
    %117 = vmatpush2.msra.mxu0 0.0
    %118 = vmatprep.subr.mxu0 0.0
    %119 = vmatpush2.msra.mxu0 0.0
    %120 = vmatprep.subr.mxu0 0.0
    %121 = vmatpush2.msra.mxu0 0.0
    %122 = vmatprep.subr.mxu0 0.0
    %123 = vmatpush2.msra.mxu0 0.0
    %124 = vmatprep.subr.mxu0 0.0
    %125 = vmatpush2.msra.mxu0 0.0
    %126 = vmatprep.subr.mxu0 0.0
    %127 = vmatpush2.msra.mxu0 0.0
    %128 = vmatprep.subr.mxu0 0.0
    %129 = vmatpush2.msra.mxu0 0.0
    %130 = vmatprep.subr.mxu0 0.0
    %131 = vmatpush2.msra.mxu0 0.0
    %132 = vmatprep.subr.mxu0 0.0
    %133 = vmatpush2.msra.mxu0 0.0
    %134 = vmatprep.subr.mxu0 0.0
    %135 = vmatpush2.msra.mxu0 0.0
    %136 = vmatprep.subr.mxu0 0.0
    %137 = vmatpush2.msra.mxu0 0.0
    %138 = vmatprep.subr.mxu0 0.0
    %139 = vmatpush2.msra.mxu0 0.0
    %140 = vmatprep.subr.mxu0 0.0
    %141 = vmatpush2.msra.mxu0 0.0
    %142 = vmatprep.subr.mxu0 0.0
    %143 = vmatpush2.msra.mxu0 0.0
    %144 = vmatprep.subr.mxu0 0.0
    %145 = vmatpush2.msra.mxu0 0.0
    %146 = vmatprep.subr.mxu0 0.0
    %147 = vmatpush2.msra.mxu0 0.0
    %148 = vmatprep.mubr.f32.mxu0 0.0
    %149 = vmatmul.mubr.f32.gmra.mxu0 %v82
    %v150 = vpop.f32.mrf.mxu0
    %v151 = vadd.f32 0.0, %v150
    %v152 = vpop.f32.mrf.mxu0
    %153 = vdwg.mxu0
    %vm154 = vcmask 130048
    %v156 = vsel %vm154, %v72, 0
    %158 = vmatprep.subr.mxu0 0.0
    %159 = vmatpush1.msra.mxu0 0.0
    %160 = vmatprep.subr.mxu0 0.0
    %161 = vmatpush1.msra.mxu0 0.0
    %162 = vmatprep.subr.mxu0 0.0
    %163 = vmatpush1.msra.mxu0 0.0
    %164 = vmatprep.subr.mxu0 0.0
    %165 = vmatpush1.msra.mxu0 0.0
    %166 = vmatprep.subr.mxu0 0.0
    %167 = vmatpush1.msra.mxu0 0.0
    %168 = vmatprep.subr.mxu0 0.0
    %169 = vmatpush1.msra.mxu0 0.0
    %170 = vmatprep.subr.mxu0 0.0
    %171 = vmatpush1.msra.mxu0 0.0
    %172 = vmatprep.subr.mxu0 0.0
    %173 = vmatpush1.msra.mxu0 0.0
    %174 = vmatprep.subr.mxu0 0.0
    %175 = vmatpush1.msra.mxu0 0.0
    %176 = vmatprep.subr.mxu0 0.0
    %177 = vmatpush1.msra.mxu0 0.0
    %178 = vmatprep.subr.mxu0 0.0
    %179 = vmatpush1.msra.mxu0 0.0
    %180 = vmatprep.subr.mxu0 0.0
    %181 = vmatpush1.msra.mxu0 0.0
    %182 = vmatprep.subr.mxu0 0.0
    %183 = vmatpush1.msra.mxu0 0.0
    %184 = vmatprep.subr.mxu0 0.0
    %185 = vmatpush1.msra.mxu0 0.0
    %186 = vmatprep.subr.mxu0 0.0
    %187 = vmatpush1.msra.mxu0 %v74
    %188 = vmatprep.subr.mxu0 0.0
    %189 = vmatpush1.msra.mxu0 %v73
    %190 = vmatprep.subr.mxu0 0.0
    %191 = vmatpush2.msra.mxu0 0.0
    %192 = vmatprep.subr.mxu0 0.0
    %193 = vmatpush2.msra.mxu0 0.0
    %194 = vmatprep.subr.mxu0 0.0
    %195 = vmatpush2.msra.mxu0 0.0
    %196 = vmatprep.subr.mxu0 0.0
    %197 = vmatpush2.msra.mxu0 0.0
    %198 = vmatprep.subr.mxu0 0.0
    %199 = vmatpush2.msra.mxu0 0.0
    %200 = vmatprep.subr.mxu0 0.0
    %201 = vmatpush2.msra.mxu0 0.0
    %202 = vmatprep.subr.mxu0 0.0
    %203 = vmatpush2.msra.mxu0 0.0
    %204 = vmatprep.subr.mxu0 0.0
    %205 = vmatpush2.msra.mxu0 0.0
    %206 = vmatprep.subr.mxu0 0.0
    %207 = vmatpush2.msra.mxu0 0.0
    %208 = vmatprep.subr.mxu0 0.0
    %209 = vmatpush2.msra.mxu0 0.0
    %210 = vmatprep.subr.mxu0 0.0
    %211 = vmatpush2.msra.mxu0 0.0
    %212 = vmatprep.subr.mxu0 0.0
    %213 = vmatpush2.msra.mxu0 0.0
    %214 = vmatprep.subr.mxu0 0.0
    %215 = vmatpush2.msra.mxu0 0.0
    %216 = vmatprep.subr.mxu0 0.0
    %217 = vmatpush2.msra.mxu0 0.0
    %218 = vmatprep.subr.mxu0 0.0
    %219 = vmatpush2.msra.mxu0 0.0
    %220 = vmatprep.subr.mxu0 0.0
    %221 = vmatpush2.msra.mxu0 0.0
    %222 = vmatprep.mubr.f32.mxu0 0.0
    %223 = vmatmul.mubr.f32.gmra.mxu0 %v156
    %v224 = vpop.f32.mrf.mxu0
    %v225 = vadd.f32 %v151, %v224
    %v226 = vpop.f32.mrf.mxu0
    %227 = vdwg.mxu0
    %v228 = vld [vmem:[%s4] sm:$0x1]
    %v230 = vlaneseq
    %v231 = vshrl.u32 %v230, 7
    %v232 = vsub.s32 0, %v231
    %v233 = vrot.slane %v228, %v232
    %v235 = vadd.f32 %v225, %v233
    %v236 = vxor.u32 %v235, 2147483648
    %v237 = vmul.f32 %v236, 1.442695
    %v238 = vpow.pop %v237
    %v239 = vadd.f32 %v238, 1.0
    %v240 = vrcp.pop %v239
    %v241 = vmul.f32 1.0, %v240
    %242 = vst.msk [vmem:[#allocation10] sm:$0xff] %vm80, %v241
    // Predicated region
    $region38: #{tpu_custom_call.1} parent=1 // pred_check
      _
    $region39: #{tpu_custom_call.1} parent=1 // pred_check_branch
      %244 = sbr.rel (0) target = $region41
    $region40: #{tpu_custom_call.1} parent=1 // pred_region
      %s246 = ssub.s32 128, 128
      %247 = vsyncadd [#allocation4], %s246
      %s249 = sshll.u32 [#allocation10], 4
      %s250 = int_to_ptr.vmem [resolvable:$true] %s249
      %252 = dma.vmem_to_hbm [thread:$0]  %s250, 128, %s5, [#allocation4]
    $region41: #{tpu_custom_call.1} parent=1 // pred_fallthru
      _
    // Predicated region
    $region42: #{tpu_custom_call.1} parent=1 // pred_check
      _
    $region43: #{tpu_custom_call.1} parent=1 // pred_check_branch
      %254 = sbr.rel (0) target = $region45
    $region44: #{tpu_custom_call.1} parent=1 // pred_region
      %255 = dma.done [#allocation4], 128
    $region45: #{tpu_custom_call.1} parent=1 // pred_fallthru
      _
    %256 = vsyncpa [#allocation3], 1
    %257 = vsyncpa [#allocation6], 1
    %258 = vsyncpa [#allocation9], 1
    %259 = vsyncpa [#allocation4], 1

// kernel: tpu_custom_call.1
$region0: #{tpu_custom_call.1}
  #allocation0 [shape = 'u32[]', space=smem, size = 0x4, offset = 0x4, fixed_abs, tag = 'smem constant byte address 0x4 - core index']
  #allocation1 [shape = 'u32[144,128]{1,0:T(1,128)}', space=vmem, size = 0x12000, scoped, tag = 'internal scratch']
  %s0 = inlined_call_operand.hbm [shape: f32[8,16], index: 0, kind: input, shape index: {}]
  %s1 = inlined_call_operand.hbm [shape: f32[8,32], index: 1, kind: input, shape index: {}]
  %s2 = inlined_call_operand.hbm [shape: f32[16,32], index: 2, kind: input, shape index: {}]
  %s3 = inlined_call_operand.hbm [shape: f32[32,32], index: 3, kind: input, shape index: {}]
  %s4 = inlined_call_operand.vmem [shape: f32[1,32], index: 4, kind: input, shape index: {}]
  %s5 = inlined_call_operand.hbm [shape: f32[8,32], index: 5, kind: output, shape index: {}]
  %s6 = sld [smem:[#allocation0]]
  $region46: #{tpu_custom_call.1} parent=0
    _
  %s8 = ssub.s32 1, %s6
  %s9 = scalar_select 0, %s8, %s6
  $region1: #{tpu_custom_call.1} parent=0
    #allocation2 [shape = 'u8[4096]{0}', space=vmem, size = 0x1000, scoped, tag = 'input window, operand 0, single buffered']
    #allocation3 [shape = 's32[1]{0}', space=sflag, size = 0x4, scoped, tag = 'scoped memory for tpu_custom_call.1']
    #allocation4 [shape = 's32[1]{0}', space=sflag, size = 0x4, scoped, tag = 'scoped memory for tpu_custom_call.1']
    #allocation5 [shape = 'u8[4096]{0}', space=vmem, size = 0x1000, scoped, tag = 'input window, operand 1, single buffered']
    #allocation6 [shape = 's32[1]{0}', space=sflag, size = 0x4, scoped, tag = 'scoped memory for tpu_custom_call.1']
    #allocation7 [shape = 'u8[8192]{0}', space=vmem, size = 0x2000, scoped, tag = 'input window, operand 2, single buffered']
    #allocation8 [shape = 'u8[16384]{0}', space=vmem, size = 0x4000, scoped, tag = 'input window, operand 3, single buffered']
    #allocation9 [shape = 's32[1]{0}', space=sflag, size = 0x4, scoped, tag = 'scoped memory for tpu_custom_call.1']
    #allocation10 [shape = 'u8[4096]{0}', space=vmem, size = 0x1000, scoped, tag = 'output window, operand 0, single buffered']
    %10 = vsyncpa [#allocation3], 0
    %11 = vsyncpa [#allocation6], 0
    %12 = vsyncpa [#allocation9], 0
    %13 = vsyncpa [#allocation4], 0
    // Predicated region
    $region2: #{tpu_custom_call.1} parent=1 // pred_check
      _
    $region3: #{tpu_custom_call.1} parent=1 // pred_check_branch
      %15 = sbr.rel (0) target = $region5
    $region4: #{tpu_custom_call.1} parent=1 // pred_region
      %s17 = ssub.s32 128, 128
      %18 = vsyncadd [#allocation3], %s17
      %s20 = sshll.u32 [#allocation2], 4
      %s21 = int_to_ptr.vmem [resolvable:$true] %s20
      %23 = dma.hbm_to_vmem [thread:$0]  %s0, 128, %s21, [#allocation3]
    $region5: #{tpu_custom_call.1} parent=1 // pred_fallthru
      _
    // Predicated region
    $region6: #{tpu_custom_call.1} parent=1 // pred_check
      _
    $region7: #{tpu_custom_call.1} parent=1 // pred_check_branch
      %25 = sbr.rel (0) target = $region9
    $region8: #{tpu_custom_call.1} parent=1 // pred_region
      %s27 = ssub.s32 128, 128
      %28 = vsyncadd [#allocation6], %s27
      %s30 = sshll.u32 [#allocation5], 4
      %s31 = int_to_ptr.vmem [resolvable:$true] %s30
      %33 = dma.hbm_to_vmem [thread:$0]  %s1, 128, %s31, [#allocation6]
    $region9: #{tpu_custom_call.1} parent=1 // pred_fallthru
      _
    // Predicated region
    $region10: #{tpu_custom_call.1} parent=1 // pred_check
      _
    $region11: #{tpu_custom_call.1} parent=1 // pred_check_branch
      %35 = sbr.rel (0) target = $region13
    $region12: #{tpu_custom_call.1} parent=1 // pred_region
      %s37 = ssub.s32 256, 256
      %38 = vsyncadd [#allocation6], %s37
      %s39 = sshll.u32 [#allocation7], 4
      %s40 = int_to_ptr.vmem [resolvable:$true] %s39
      %45 = dma.hbm_to_vmem [thread:$0]  %s2, 256, %s40, [#allocation6], 128, 128, 8
    $region13: #{tpu_custom_call.1} parent=1 // pred_fallthru
      _
    // Predicated region
    $region14: #{tpu_custom_call.1} parent=1 // pred_check
      _
    $region15: #{tpu_custom_call.1} parent=1 // pred_check_branch
      %47 = sbr.rel (0) target = $region17
    $region16: #{tpu_custom_call.1} parent=1 // pred_region
      %s49 = ssub.s32 512, 512
      %50 = vsyncadd [#allocation9], %s49
      %s51 = sshll.u32 [#allocation8], 4
      %s52 = int_to_ptr.vmem [resolvable:$true] %s51
      %57 = dma.hbm_to_vmem [thread:$0]  %s3, 512, %s52, [#allocation9], 128, 128, 8
    $region17: #{tpu_custom_call.1} parent=1 // pred_fallthru
      _
    // Predicated region
    $region18: #{tpu_custom_call.1} parent=1 // pred_check
      _
    $region19: #{tpu_custom_call.1} parent=1 // pred_check_branch
      %59 = sbr.rel (0) target = $region21
    $region20: #{tpu_custom_call.1} parent=1 // pred_region
      _
    $region21: #{tpu_custom_call.1} parent=1 // pred_fallthru
      _
    // Predicated region
    $region22: #{tpu_custom_call.1} parent=1 // pred_check
      _
    $region23: #{tpu_custom_call.1} parent=1 // pred_check_branch
      %61 = sbr.rel (0) target = $region25
    $region24: #{tpu_custom_call.1} parent=1 // pred_region
      %62 = dma.done [#allocation3], 128
    $region25: #{tpu_custom_call.1} parent=1 // pred_fallthru
      _
    // Predicated region
    $region26: #{tpu_custom_call.1} parent=1 // pred_check
      _
    $region27: #{tpu_custom_call.1} parent=1 // pred_check_branch
      %64 = sbr.rel (0) target = $region29
    $region28: #{tpu_custom_call.1} parent=1 // pred_region
      %65 = dma.done [#allocation6], 128
    $region29: #{tpu_custom_call.1} parent=1 // pred_fallthru
      _
    // Predicated region
    $region30: #{tpu_custom_call.1} parent=1 // pred_check
      _
    $region31: #{tpu_custom_call.1} parent=1 // pred_check_branch
      %67 = sbr.rel (0) target = $region33
    $region32: #{tpu_custom_call.1} parent=1 // pred_region
      %68 = dma.done [#allocation6], 256
    $region33: #{tpu_custom_call.1} parent=1 // pred_fallthru
      _
    // Predicated region
    $region34: #{tpu_custom_call.1} parent=1 // pred_check
      _
    $region35: #{tpu_custom_call.1} parent=1 // pred_check_branch
      %70 = sbr.rel (0) target = $region37
    $region36: #{tpu_custom_call.1} parent=1 // pred_region
      %71 = dma.done [#allocation9], 512
    $region37: #{tpu_custom_call.1} parent=1 // pred_fallthru
      _
    %v72 = vld [vmem:[#allocation2] sm:$0xff]
    %v73 = vld [vmem:[#allocation7] sm:$0xff]
    %v74 = vld [vmem:[#allocation7 + $0x8] sm:$0xff]
    %v75 = vld [vmem:[#allocation5] sm:$0xff]
    %v76 = vld [vmem:[#allocation8] sm:$0xff]
    %v77 = vld [vmem:[#allocation8 + $0x8] sm:$0xff]
    %v78 = vld [vmem:[#allocation8 + $0x10] sm:$0xff]
    %v79 = vld [vmem:[#allocation8 + $0x18] sm:$0xff]
    %vm80 = vcmask 261120
    %v82 = vsel %vm80, %v75, 0
    %84 = vmatprep.subr.mxu0 0.0
    %85 = vmatpush1.msra.mxu0 0.0
    %86 = vmatprep.subr.mxu0 0.0
    %87 = vmatpush1.msra.mxu0 0.0
    %88 = vmatprep.subr.mxu0 0.0
    %89 = vmatpush1.msra.mxu0 0.0
    %90 = vmatprep.subr.mxu0 0.0
    %91 = vmatpush1.msra.mxu0 0.0
    %92 = vmatprep.subr.mxu0 0.0
    %93 = vmatpush1.msra.mxu0 0.0
    %94 = vmatprep.subr.mxu0 0.0
    %95 = vmatpush1.msra.mxu0 0.0
    %96 = vmatprep.subr.mxu0 0.0
    %97 = vmatpush1.msra.mxu0 0.0
    %98 = vmatprep.subr.mxu0 0.0
    %99 = vmatpush1.msra.mxu0 0.0
    %100 = vmatprep.subr.mxu0 0.0
    %101 = vmatpush1.msra.mxu0 0.0
    %102 = vmatprep.subr.mxu0 0.0
    %103 = vmatpush1.msra.mxu0 0.0
    %104 = vmatprep.subr.mxu0 0.0
    %105 = vmatpush1.msra.mxu0 0.0
    %106 = vmatprep.subr.mxu0 0.0
    %107 = vmatpush1.msra.mxu0 0.0
    %108 = vmatprep.subr.mxu0 0.0
    %109 = vmatpush1.msra.mxu0 %v79
    %110 = vmatprep.subr.mxu0 0.0
    %111 = vmatpush1.msra.mxu0 %v78
    %112 = vmatprep.subr.mxu0 0.0
    %113 = vmatpush1.msra.mxu0 %v77
    %114 = vmatprep.subr.mxu0 0.0
    %115 = vmatpush1.msra.mxu0 %v76
    %116 = vmatprep.subr.mxu0 0.0
    %117 = vmatpush2.msra.mxu0 0.0
    %118 = vmatprep.subr.mxu0 0.0
    %119 = vmatpush2.msra.mxu0 0.0
    %120 = vmatprep.subr.mxu0 0.0
    %121 = vmatpush2.msra.mxu0 0.0
    %122 = vmatprep.subr.mxu0 0.0
    %123 = vmatpush2.msra.mxu0 0.0
    %124 = vmatprep.subr.mxu0 0.0
    %125 = vmatpush2.msra.mxu0 0.0
    %126 = vmatprep.subr.mxu0 0.0
    %127 = vmatpush2.msra.mxu0 0.0
    %128 = vmatprep.subr.mxu0 0.0
    %129 = vmatpush2.msra.mxu0 0.0
    %130 = vmatprep.subr.mxu0 0.0
    %131 = vmatpush2.msra.mxu0 0.0
    %132 = vmatprep.subr.mxu0 0.0
    %133 = vmatpush2.msra.mxu0 0.0
    %134 = vmatprep.subr.mxu0 0.0
    %135 = vmatpush2.msra.mxu0 0.0
    %136 = vmatprep.subr.mxu0 0.0
    %137 = vmatpush2.msra.mxu0 0.0
    %138 = vmatprep.subr.mxu0 0.0
    %139 = vmatpush2.msra.mxu0 0.0
    %140 = vmatprep.subr.mxu0 0.0
    %141 = vmatpush2.msra.mxu0 0.0
    %142 = vmatprep.subr.mxu0 0.0
    %143 = vmatpush2.msra.mxu0 0.0
    %144 = vmatprep.subr.mxu0 0.0
    %145 = vmatpush2.msra.mxu0 0.0
    %146 = vmatprep.subr.mxu0 0.0
    %147 = vmatpush2.msra.mxu0 0.0
    %148 = vmatprep.mubr.f32.mxu0 0.0
    %149 = vmatmul.mubr.f32.gmra.mxu0 %v82
    %v150 = vpop.f32.mrf.mxu0
    %v151 = vadd.f32 0.0, %v150
    %v152 = vpop.f32.mrf.mxu0
    %153 = vdwg.mxu0
    %vm154 = vcmask 130048
    %v156 = vsel %vm154, %v72, 0
    %158 = vmatprep.subr.mxu0 0.0
    %159 = vmatpush1.msra.mxu0 0.0
    %160 = vmatprep.subr.mxu0 0.0
    %161 = vmatpush1.msra.mxu0 0.0
    %162 = vmatprep.subr.mxu0 0.0
    %163 = vmatpush1.msra.mxu0 0.0
    %164 = vmatprep.subr.mxu0 0.0
    %165 = vmatpush1.msra.mxu0 0.0
    %166 = vmatprep.subr.mxu0 0.0
    %167 = vmatpush1.msra.mxu0 0.0
    %168 = vmatprep.subr.mxu0 0.0
    %169 = vmatpush1.msra.mxu0 0.0
    %170 = vmatprep.subr.mxu0 0.0
    %171 = vmatpush1.msra.mxu0 0.0
    %172 = vmatprep.subr.mxu0 0.0
    %173 = vmatpush1.msra.mxu0 0.0
    %174 = vmatprep.subr.mxu0 0.0
    %175 = vmatpush1.msra.mxu0 0.0
    %176 = vmatprep.subr.mxu0 0.0
    %177 = vmatpush1.msra.mxu0 0.0
    %178 = vmatprep.subr.mxu0 0.0
    %179 = vmatpush1.msra.mxu0 0.0
    %180 = vmatprep.subr.mxu0 0.0
    %181 = vmatpush1.msra.mxu0 0.0
    %182 = vmatprep.subr.mxu0 0.0
    %183 = vmatpush1.msra.mxu0 0.0
    %184 = vmatprep.subr.mxu0 0.0
    %185 = vmatpush1.msra.mxu0 0.0
    %186 = vmatprep.subr.mxu0 0.0
    %187 = vmatpush1.msra.mxu0 %v74
    %188 = vmatprep.subr.mxu0 0.0
    %189 = vmatpush1.msra.mxu0 %v73
    %190 = vmatprep.subr.mxu0 0.0
    %191 = vmatpush2.msra.mxu0 0.0
    %192 = vmatprep.subr.mxu0 0.0
    %193 = vmatpush2.msra.mxu0 0.0
    %194 = vmatprep.subr.mxu0 0.0
    %195 = vmatpush2.msra.mxu0 0.0
    %196 = vmatprep.subr.mxu0 0.0
    %197 = vmatpush2.msra.mxu0 0.0
    %198 = vmatprep.subr.mxu0 0.0
    %199 = vmatpush2.msra.mxu0 0.0
    %200 = vmatprep.subr.mxu0 0.0
    %201 = vmatpush2.msra.mxu0 0.0
    %202 = vmatprep.subr.mxu0 0.0
    %203 = vmatpush2.msra.mxu0 0.0
    %204 = vmatprep.subr.mxu0 0.0
    %205 = vmatpush2.msra.mxu0 0.0
    %206 = vmatprep.subr.mxu0 0.0
    %207 = vmatpush2.msra.mxu0 0.0
    %208 = vmatprep.subr.mxu0 0.0
    %209 = vmatpush2.msra.mxu0 0.0
    %210 = vmatprep.subr.mxu0 0.0
    %211 = vmatpush2.msra.mxu0 0.0
    %212 = vmatprep.subr.mxu0 0.0
    %213 = vmatpush2.msra.mxu0 0.0
    %214 = vmatprep.subr.mxu0 0.0
    %215 = vmatpush2.msra.mxu0 0.0
    %216 = vmatprep.subr.mxu0 0.0
    %217 = vmatpush2.msra.mxu0 0.0
    %218 = vmatprep.subr.mxu0 0.0
    %219 = vmatpush2.msra.mxu0 0.0
    %220 = vmatprep.subr.mxu0 0.0
    %221 = vmatpush2.msra.mxu0 0.0
    %222 = vmatprep.mubr.f32.mxu0 0.0
    %223 = vmatmul.mubr.f32.gmra.mxu0 %v156
    %v224 = vpop.f32.mrf.mxu0
    %v225 = vadd.f32 %v151, %v224
    %v226 = vpop.f32.mrf.mxu0
    %227 = vdwg.mxu0
    %v228 = vld [vmem:[%s4] sm:$0x1]
    %v230 = vlaneseq
    %v231 = vshrl.u32 %v230, 7
    %v232 = vsub.s32 0, %v231
    %v233 = vrot.slane %v228, %v232
    %v235 = vadd.f32 %v225, %v233
    %v236 = vxor.u32 %v235, 2147483648
    %v237 = vmul.f32 %v236, 1.442695
    %v238 = vpow.pop %v237
    %v239 = vadd.f32 %v238, 1.0
    %v240 = vrcp.pop %v239
    %v241 = vmul.f32 1.0, %v240
    %242 = vst.msk [vmem:[#allocation10] sm:$0xff] %vm80, %v241
    // Predicated region
    $region38: #{tpu_custom_call.1} parent=1 // pred_check
      _
    $region39: #{tpu_custom_call.1} parent=1 // pred_check_branch
      %244 = sbr.rel (0) target = $region41
    $region40: #{tpu_custom_call.1} parent=1 // pred_region
      %s246 = ssub.s32 128, 128
      %247 = vsyncadd [#allocation4], %s246
      %s249 = sshll.u32 [#allocation10], 4
      %s250 = int_to_ptr.vmem [resolvable:$true] %s249
      %252 = dma.vmem_to_hbm [thread:$0]  %s250, 128, %s5, [#allocation4]
    $region41: #{tpu_custom_call.1} parent=1 // pred_fallthru
      _
    // Predicated region
    $region42: #{tpu_custom_call.1} parent=1 // pred_check
      _
    $region43: #{tpu_custom_call.1} parent=1 // pred_check_branch
      %254 = sbr.rel (0) target = $region45
    $region44: #{tpu_custom_call.1} parent=1 // pred_region
      %255 = dma.done [#allocation4], 128
    $region45: #{tpu_custom_call.1} parent=1 // pred_fallthru
      _
    %256 = vsyncpa [#allocation3], 1
    %257 = vsyncpa [#allocation6], 1
    %258 = vsyncpa [#allocation9], 1
    %259 = vsyncpa [#allocation4], 1

</llo_original>
